<compile_context>
chip_gen: v6e
topology: v6e:2x2x1
jax: 0.10.0
libtpu: 0.0.40
codegen_flags: <defaults>
</compile_context>

<pallas_src>
import jax
import jax.numpy as jnp
from jax.experimental import pallas as pl
from jax.experimental.pallas import tpu as pltpu  # noqa: F401  (TPU backend)

LATENT_DIM = 2
HIDDEN_DIM = 64
OUTPUT_DIM = 2
PAD = 128                 # lane-dense padded width of activations / weights
BIAS_ROW = HIDDEN_DIM     # row 64 of each padded weight carries the layer bias
N_MXU_LAYERS = 4          # fc2, fc3, fc4, fused output head


def _decoder_kernel(z_ref, small_ref, w_ref, out_ref):
    z = z_ref[...]                      # (B, 2)   f32
    small = small_ref[...]              # (8, 128) f32 packed slab

    w1_r0 = small[0:1, :]               # fc1 weight row 0, zero-padded to 128
    w1_r1 = small[1:2, :]               # fc1 weight row 1
    b1 = small[2:3, :]                  # fc1 bias; lane 64 = 1.0 (bias seed)

    # fc1 (K = 2): two broadcast FMAs on the VPU, lane-dense (B, 128) result.
    # Lane 64 becomes exactly 1.0 and self-propagates through relu + matmuls,
    # turning every folded bias row into a plain matmul contribution.
    h = jnp.maximum(z[:, 0:1] * w1_r0 + z[:, 1:2] * w1_r1 + b1, 0.0)

    # fc2..fc4: exact 128x128 bf16 MXU passes, f32 accumulation, biases folded
    # into row 64 of each padded weight.  Epilogue = relu (f32, v5e-safe).
    for i in range(3):
        h = jnp.dot(h.astype(jnp.bfloat16), w_ref[i],
                    preferred_element_type=jnp.float32)
        h = jnp.maximum(h, 0.0)

    # Fused mean|log_var head (bias folded): one matmul, lane-dense store.
    out = jnp.dot(h.astype(jnp.bfloat16), w_ref[3],
                  preferred_element_type=jnp.float32)
    out_ref[...] = out.astype(out_ref.dtype)


def decoder_forward(z, packed):
    """z: (B, latent_dim) f32 -> (mean, log_var), each (B, output_dim) f32."""
    small, w = packed
    B = z.shape[0]

    flops = 2 * B * (LATENT_DIM * PAD + N_MXU_LAYERS * PAD * PAD)
    bytes_accessed = (z.size * 4 + small.size * 4 + w.size * 2 + B * PAD * 4)

    out = pl.pallas_call(
        _decoder_kernel,
        out_shape=jax.ShapeDtypeStruct((B, PAD), jnp.float32),
        in_specs=[
            pl.BlockSpec(z.shape, lambda: (0, 0)),
            pl.BlockSpec(small.shape, lambda: (0, 0)),
            pl.BlockSpec(w.shape, lambda: (0, 0, 0)),
        ],
        out_specs=pl.BlockSpec((B, PAD), lambda: (0, 0)),
        cost_estimate=pl.CostEstimate(
            flops=flops, transcendentals=0, bytes_accessed=bytes_accessed),
    )(z, small, w)

    return out[:, 0:OUTPUT_DIM], out[:, OUTPUT_DIM:2 * OUTPUT_DIM]


def init_params(key):
    """Deterministic init mirroring nn.Linear default U[-1/sqrt(fan_in), +...].

    Weights are stored pre-transposed as (in_features, out_features)."""
    dims = [(LATENT_DIM, HIDDEN_DIM),   # fc1
            (HIDDEN_DIM, HIDDEN_DIM),   # fc2
            (HIDDEN_DIM, HIDDEN_DIM),   # fc3
            (HIDDEN_DIM, HIDDEN_DIM),   # fc4
            (HIDDEN_DIM, OUTPUT_DIM),   # fc_out_mean
            (HIDDEN_DIM, OUTPUT_DIM)]   # fc_out_log_var
    ks = jax.random.split(key, 2 * len(dims))
    params = []
    for i, (fan_in, fan_out) in enumerate(dims):
        bound = float(fan_in) ** -0.5
        w = jax.random.uniform(ks[2 * i], (fan_in, fan_out), jnp.float32,
                               -bound, bound)
        b = jax.random.uniform(ks[2 * i + 1], (fan_out,), jnp.float32,
                               -bound, bound)
        params.append((w, b))
    return params


def pack_params(params):
    """Pack all 12 tensors into 2 kernel operands (1 f32 slab + 1 bf16 slab)."""
    (w1, b1), (w2, b2), (w3, b3), (w4, b4), (wm, bm), (wv, bv) = params

    # Small f32 slab: fc1 weight rows + fc1 bias (+ the 1.0 bias-lane seed).
    small = jnp.zeros((8, PAD), jnp.float32)
    small = small.at[0:2, 0:HIDDEN_DIM].set(w1)
    small = small.at[2, 0:HIDDEN_DIM].set(b1)
    small = small.at[2, BIAS_ROW].set(1.0)          # seeds the constant-1 lane

    def pad_hidden(w, b):
        wp = jnp.zeros((PAD, PAD), jnp.float32)
        wp = wp.at[0:HIDDEN_DIM, 0:HIDDEN_DIM].set(w)
        wp = wp.at[BIAS_ROW, 0:HIDDEN_DIM].set(b)    # folded bias
        wp = wp.at[BIAS_ROW, BIAS_ROW].set(1.0)      # propagate the 1.0 lane
        return wp

    head = jnp.zeros((PAD, PAD), jnp.float32)        # [Wm | Wv | 0...], bias in row 64
    head = head.at[0:HIDDEN_DIM, 0:OUTPUT_DIM].set(wm)
    head = head.at[0:HIDDEN_DIM, OUTPUT_DIM:2 * OUTPUT_DIM].set(wv)
    head = head.at[BIAS_ROW, 0:OUTPUT_DIM].set(bm)
    head = head.at[BIAS_ROW, OUTPUT_DIM:2 * OUTPUT_DIM].set(bv)

    w = jnp.stack([pad_hidden(w2, b2), pad_hidden(w3, b3),
                   pad_hidden(w4, b4), head]).astype(jnp.bfloat16)  # (4,128,128)
    return small, w


def decoder_reference(z, packed):
    """Pure-JAX reference mirroring the kernel math (bf16 weights, f32 accum)."""
    small, w = packed
    h = jnp.maximum(z @ small[0:2, :] + small[2:3, :], 0.0)
    for i in range(3):
        h = jnp.maximum(
            jnp.dot(h.astype(jnp.bfloat16), w[i],
                    preferred_element_type=jnp.float32), 0.0)
    out = jnp.dot(h.astype(jnp.bfloat16), w[3],
                  preferred_element_type=jnp.float32)
    return out[:, 0:OUTPUT_DIM], out[:, OUTPUT_DIM:2 * OUTPUT_DIM]


def decoder_reference_f32(z, params):
    """Straight f32 transcription of the PyTorch module (packing sanity check)."""
    (w1, b1), (w2, b2), (w3, b3), (w4, b4), (wm, bm), (wv, bv) = params
    h = jnp.maximum(z @ w1 + b1, 0.0)
    h = jnp.maximum(h @ w2 + b2, 0.0)
    h = jnp.maximum(h @ w3 + b3, 0.0)
    h = jnp.maximum(h @ w4 + b4, 0.0)
    return h @ wm + bm, h @ wv + bv


if __name__ == "__main__":
    key = jax.random.PRNGKey(0)
    kz, kp = jax.random.split(key)
    B = 8
    z = jax.random.normal(kz, (B, LATENT_DIM), jnp.float32)
    params = init_params(kp)
    packed = pack_params(params)

    mean, log_var = decoder_forward(z, packed)
    jax.block_until_ready((mean, log_var))
    assert mean.shape == (B, OUTPUT_DIM) and log_var.shape == (B, OUTPUT_DIM)

    # Exact-math mirror (same bf16 weight casts / folded biases).
    mean_ref, logvar_ref = decoder_reference(z, packed)
    assert jnp.allclose(mean, mean_ref, atol=1e-3, rtol=1e-3)
    assert jnp.allclose(log_var, logvar_ref, atol=1e-3, rtol=1e-3)

    # Fidelity vs the true f32 PyTorch forward (loose: bf16 MXU weights).
    mean_f32, logvar_f32 = decoder_reference_f32(z, params)
    assert jnp.allclose(mean, mean_f32, atol=5e-2)
    assert jnp.allclose(log_var, logvar_f32, atol=5e-2)

    print("KERNEL_OK")
</pallas_src>

<mosaic_0001>
module attributes {stable_mosaic.version = 11 : i64} {
  func.func @_decoder_kernel(%arg0: memref<8x2xf32, #tpu.memory_space<vmem>>, %arg1: memref<8x128xf32, #tpu.memory_space<vmem>>, %arg2: memref<4x128x128xbf16, #tpu.memory_space<vmem>>, %arg3: memref<8x128xf32, #tpu.memory_space<vmem>>) attributes {dimension_semantics = [], scalar_prefetch = 0 : i64, scratch_operands = 0 : i64, tpu.core_type = #tpu.core_type<tc>} {
    %c0 = arith.constant 0 : index
    %c0_0 = arith.constant 0 : index
    %0 = vector.load %arg0[%c0, %c0_0] : memref<8x2xf32, #tpu.memory_space<vmem>>, vector<8x2xf32>
    %c0_1 = arith.constant 0 : index
    %c0_2 = arith.constant 0 : index
    %1 = vector.load %arg1[%c0_1, %c0_2] : memref<8x128xf32, #tpu.memory_space<vmem>>, vector<8x128xf32>
    %2 = vector.extract_strided_slice %1 {offsets = [0, 0], sizes = [1, 128], strides = [1, 1]} : vector<8x128xf32> to vector<1x128xf32>
    %3 = vector.extract_strided_slice %1 {offsets = [1, 0], sizes = [1, 128], strides = [1, 1]} : vector<8x128xf32> to vector<1x128xf32>
    %4 = vector.extract_strided_slice %1 {offsets = [2, 0], sizes = [1, 128], strides = [1, 1]} : vector<8x128xf32> to vector<1x128xf32>
    %5 = vector.extract_strided_slice %0 {offsets = [0, 0], sizes = [8, 1], strides = [1, 1]} : vector<8x2xf32> to vector<8x1xf32>
    %6 = vector.broadcast %5 : vector<8x1xf32> to vector<8x128xf32>
    %7 = vector.broadcast %2 : vector<1x128xf32> to vector<8x128xf32>
    %8 = arith.mulf %6, %7 : vector<8x128xf32>
    %9 = vector.extract_strided_slice %0 {offsets = [0, 1], sizes = [8, 1], strides = [1, 1]} : vector<8x2xf32> to vector<8x1xf32>
    %10 = vector.broadcast %9 : vector<8x1xf32> to vector<8x128xf32>
    %11 = vector.broadcast %3 : vector<1x128xf32> to vector<8x128xf32>
    %12 = arith.mulf %10, %11 : vector<8x128xf32>
    %13 = arith.addf %8, %12 : vector<8x128xf32>
    %14 = vector.broadcast %4 : vector<1x128xf32> to vector<8x128xf32>
    %15 = arith.addf %13, %14 : vector<8x128xf32>
    %cst = arith.constant 0.000000e+00 : f32
    %16 = vector.broadcast %cst : f32 to vector<8x128xf32>
    %17 = arith.maximumf %15, %16 : vector<8x128xf32>
    %18 = arith.truncf %17 : vector<8x128xf32> to vector<8x128xbf16>
    %c0_3 = arith.constant 0 : index
    %c0_4 = arith.constant 0 : index
    %c0_5 = arith.constant 0 : index
    %19 = vector.load %arg2[%c0_3, %c0_4, %c0_5] : memref<4x128x128xbf16, #tpu.memory_space<vmem>>, vector<1x128x128xbf16>
    %20 = vector.shape_cast %19 : vector<1x128x128xbf16> to vector<128x128xbf16>
    %cst_6 = arith.constant dense<0.000000e+00> : vector<8x128xf32>
    %21 = tpu.matmul %18, %20, %cst_6 {dimension_numbers = #tpu.dot_dimension_numbers<[1], [0], [0], [1], [0, 0, 1, 1], [], []>} : vector<8x128xbf16>, vector<128x128xbf16>, vector<8x128xf32> -> vector<8x128xf32>
    %cst_7 = arith.constant 0.000000e+00 : f32
    %22 = vector.broadcast %cst_7 : f32 to vector<8x128xf32>
    %23 = arith.maximumf %21, %22 : vector<8x128xf32>
    %24 = arith.truncf %23 : vector<8x128xf32> to vector<8x128xbf16>
    %c1 = arith.constant 1 : index
    %c0_8 = arith.constant 0 : index
    %c0_9 = arith.constant 0 : index
    %25 = vector.load %arg2[%c1, %c0_8, %c0_9] : memref<4x128x128xbf16, #tpu.memory_space<vmem>>, vector<1x128x128xbf16>
    %26 = vector.shape_cast %25 : vector<1x128x128xbf16> to vector<128x128xbf16>
    %cst_10 = arith.constant dense<0.000000e+00> : vector<8x128xf32>
    %27 = tpu.matmul %24, %26, %cst_10 {dimension_numbers = #tpu.dot_dimension_numbers<[1], [0], [0], [1], [0, 0, 1, 1], [], []>} : vector<8x128xbf16>, vector<128x128xbf16>, vector<8x128xf32> -> vector<8x128xf32>
    %cst_11 = arith.constant 0.000000e+00 : f32
    %28 = vector.broadcast %cst_11 : f32 to vector<8x128xf32>
    %29 = arith.maximumf %27, %28 : vector<8x128xf32>
    %30 = arith.truncf %29 : vector<8x128xf32> to vector<8x128xbf16>
    %c2 = arith.constant 2 : index
    %c0_12 = arith.constant 0 : index
    %c0_13 = arith.constant 0 : index
    %31 = vector.load %arg2[%c2, %c0_12, %c0_13] : memref<4x128x128xbf16, #tpu.memory_space<vmem>>, vector<1x128x128xbf16>
    %32 = vector.shape_cast %31 : vector<1x128x128xbf16> to vector<128x128xbf16>
    %cst_14 = arith.constant dense<0.000000e+00> : vector<8x128xf32>
    %33 = tpu.matmul %30, %32, %cst_14 {dimension_numbers = #tpu.dot_dimension_numbers<[1], [0], [0], [1], [0, 0, 1, 1], [], []>} : vector<8x128xbf16>, vector<128x128xbf16>, vector<8x128xf32> -> vector<8x128xf32>
    %cst_15 = arith.constant 0.000000e+00 : f32
    %34 = vector.broadcast %cst_15 : f32 to vector<8x128xf32>
    %35 = arith.maximumf %33, %34 : vector<8x128xf32>
    %36 = arith.truncf %35 : vector<8x128xf32> to vector<8x128xbf16>
    %c3 = arith.constant 3 : index
    %c0_16 = arith.constant 0 : index
    %c0_17 = arith.constant 0 : index
    %37 = vector.load %arg2[%c3, %c0_16, %c0_17] : memref<4x128x128xbf16, #tpu.memory_space<vmem>>, vector<1x128x128xbf16>
    %38 = vector.shape_cast %37 : vector<1x128x128xbf16> to vector<128x128xbf16>
    %cst_18 = arith.constant dense<0.000000e+00> : vector<8x128xf32>
    %39 = tpu.matmul %36, %38, %cst_18 {dimension_numbers = #tpu.dot_dimension_numbers<[1], [0], [0], [1], [0, 0, 1, 1], [], []>} : vector<8x128xbf16>, vector<128x128xbf16>, vector<8x128xf32> -> vector<8x128xf32>
    %c0_19 = arith.constant 0 : index
    %c0_20 = arith.constant 0 : index
    %40 = vector.load %arg3[%c0_19, %c0_20] : memref<8x128xf32, #tpu.memory_space<vmem>>, vector<8x128xf32>
    tpu.vector_store %arg3[%c0_19, %c0_20], %39 {strides = array<i32>} : memref<8x128xf32, #tpu.memory_space<vmem>>, vector<8x128xf32>,
    return
  }
}

</mosaic_0001>

<llo_original>
// kernel: tpu_custom_call.1
$region0: #{tpu_custom_call.1}
  #allocation0 [shape = 'u32[]', space=smem, size = 0x4, offset = 0x4, fixed_abs, tag = 'smem constant byte address 0x4 - core index']
  #allocation1 [shape = 'u32[144,128]{1,0:T(1,128)}', space=vmem, size = 0x12000, scoped, tag = 'internal scratch']
  %s0 = inlined_call_operand.vmem [shape: f32[8,2], index: 0, kind: input, shape index: {}]
  %s1 = inlined_call_operand.vmem [shape: f32[8,128], index: 1, kind: input, shape index: {}]
  %s2 = inlined_call_operand.hbm [shape: bf16[4,128,128], index: 2, kind: input, shape index: {}]
  %s3 = inlined_call_operand.hbm [shape: f32[8,128], index: 3, kind: output, shape index: {}]
  %s4 = sld [smem:[#allocation0]]
  $region26: #{tpu_custom_call.1} parent=0
    _
  %s6 = ssub.s32 1, %s4
  %s7 = scalar_select 0, %s6, %s4
  $region1: #{tpu_custom_call.1} parent=0
    #allocation2 [shape = 'u8[131072]{0}', space=vmem, size = 0x20000, scoped, tag = 'input window, operand 2, single buffered']
    #allocation3 [shape = 's32[1]{0}', space=sflag, size = 0x4, scoped, tag = 'scoped memory for tpu_custom_call.1']
    #allocation4 [shape = 's32[1]{0}', space=sflag, size = 0x4, scoped, tag = 'scoped memory for tpu_custom_call.1']
    #allocation5 [shape = 'u8[4096]{0}', space=vmem, size = 0x1000, scoped, tag = 'output window, operand 0, single buffered']
    %8 = vsyncpa [#allocation3], 0
    %9 = vsyncpa [#allocation4], 0
    // Predicated region
    $region2: #{tpu_custom_call.1} parent=1 // pred_check
      _
    $region3: #{tpu_custom_call.1} parent=1 // pred_check_branch
      %11 = sbr.rel (0) target = $region5
    $region4: #{tpu_custom_call.1} parent=1 // pred_region
      _
    $region5: #{tpu_custom_call.1} parent=1 // pred_fallthru
      _
    // Predicated region
    $region6: #{tpu_custom_call.1} parent=1 // pred_check
      _
    $region7: #{tpu_custom_call.1} parent=1 // pred_check_branch
      %13 = sbr.rel (0) target = $region9
    $region8: #{tpu_custom_call.1} parent=1 // pred_region
      _
    $region9: #{tpu_custom_call.1} parent=1 // pred_fallthru
      _
    // Predicated region
    $region10: #{tpu_custom_call.1} parent=1 // pred_check
      _
    $region11: #{tpu_custom_call.1} parent=1 // pred_check_branch
      %15 = sbr.rel (0) target = $region13
    $region12: #{tpu_custom_call.1} parent=1 // pred_region
      %s17 = ssub.s32 4096, 4096
      %18 = vsyncadd [#allocation3], %s17
      %s19 = sshll.u32 [#allocation2], 4
      %s20 = int_to_ptr.vmem [resolvable:$true] %s19
      %25 = dma.hbm_to_vmem [thread:$0]  %s2, 4096, %s20, [#allocation3], 64, 64, 4
    $region13: #{tpu_custom_call.1} parent=1 // pred_fallthru
      _
    // Predicated region
    $region14: #{tpu_custom_call.1} parent=1 // pred_check
      _
    $region15: #{tpu_custom_call.1} parent=1 // pred_check_branch
      %27 = sbr.rel (0) target = $region17
    $region16: #{tpu_custom_call.1} parent=1 // pred_region
      %28 = dma.done [#allocation3], 4096
    $region17: #{tpu_custom_call.1} parent=1 // pred_fallthru
      _
    %v30 = vld [vmem:[%s0] sm:$0xff]
    %v31 = vld [vmem:[%s1] sm:$0xff]
    %33 = vset.pattern.permute.xlu0 0
    %34 = vperm.xlu0 %33, %v30
    %v35 = vpop.permute.xlu0 %34
    %v37 = vlaneseq
    %v38 = vshrl.u32 %v37, 7
    %v39 = vsub.s32 0, %v38
    %v40 = vrot.slane %v31, %v39
    %v41 = vmul.f32 %v35, %v40
    %42 = vset.pattern.permute.xlu0 1
    %43 = vperm.xlu0 %42, %v30
    %v44 = vpop.permute.xlu0 %43
    %v46 = vlaneseq
    %v47 = vshrl.u32 %v46, 7
    %v48 = vsub.s32 1, %v47
    %v49 = vrot.slane %v31, %v48
    %v50 = vmul.f32 %v44, %v49
    %v51 = vadd.f32 %v41, %v50
    %v52 = vlaneseq
    %v53 = vshrl.u32 %v52, 7
    %v54 = vsub.s32 2, %v53
    %v55 = vrot.slane %v31, %v54
    %v56 = vadd.f32 %v51, %v55
    %v57 = vmax.f32 %v56, 0.0
    %v58 = vpack.c.bf16 %v57, %v57
    %v59 = vld [vmem:[#allocation2] sm:$0xf]
    %v60 = vld [vmem:[#allocation2 + $0x4] sm:$0xf]
    %v61 = vld [vmem:[#allocation2 + $0x8] sm:$0xf]
    %v62 = vld [vmem:[#allocation2 + $0xc] sm:$0xf]
    %v63 = vld [vmem:[#allocation2 + $0x10] sm:$0xf]
    %v64 = vld [vmem:[#allocation2 + $0x14] sm:$0xf]
    %v65 = vld [vmem:[#allocation2 + $0x18] sm:$0xf]
    %v66 = vld [vmem:[#allocation2 + $0x1c] sm:$0xf]
    %v67 = vld [vmem:[#allocation2 + $0x20] sm:$0xf]
    %v68 = vld [vmem:[#allocation2 + $0x24] sm:$0xf]
    %v69 = vld [vmem:[#allocation2 + $0x28] sm:$0xf]
    %v70 = vld [vmem:[#allocation2 + $0x2c] sm:$0xf]
    %v71 = vld [vmem:[#allocation2 + $0x30] sm:$0xf]
    %v72 = vld [vmem:[#allocation2 + $0x34] sm:$0xf]
    %v73 = vld [vmem:[#allocation2 + $0x38] sm:$0xf]
    %v74 = vld [vmem:[#allocation2 + $0x3c] sm:$0xf]
    %v91 = vunpack.c.l.b16 %v59
    %v92 = vunpack.c.l.b16 %v60
    %v93 = vunpack.c.l.b16 %v61
    %v94 = vunpack.c.l.b16 %v62
    %v95 = vunpack.c.l.b16 %v63
    %v96 = vunpack.c.l.b16 %v64
    %v97 = vunpack.c.l.b16 %v65
    %v98 = vunpack.c.l.b16 %v66
    %v99 = vunpack.c.l.b16 %v67
    %v100 = vunpack.c.l.b16 %v68
    %v101 = vunpack.c.l.b16 %v69
    %v102 = vunpack.c.l.b16 %v70
    %v103 = vunpack.c.l.b16 %v71
    %v104 = vunpack.c.l.b16 %v72
    %v105 = vunpack.c.l.b16 %v73
    %v106 = vunpack.c.l.b16 %v74
    %v107 = vpack.c.b16 %v92, %v91
    %v108 = vpack.c.b16 %v94, %v93
    %v109 = vpack.c.b16 %v96, %v95
    %v110 = vpack.c.b16 %v98, %v97
    %v111 = vpack.c.b16 %v100, %v99
    %v112 = vpack.c.b16 %v102, %v101
    %v113 = vpack.c.b16 %v104, %v103
    %v114 = vpack.c.b16 %v106, %v105
    %123 = vmatprep.subr.bf16.mxu0 0
    %124 = vmatpush1.bf16.msra.mxu0 %v114
    %125 = vmatprep.subr.bf16.mxu0 0
    %126 = vmatpush1.bf16.msra.mxu0 %v113
    %127 = vmatprep.subr.bf16.mxu0 0
    %128 = vmatpush1.bf16.msra.mxu0 %v112
    %129 = vmatprep.subr.bf16.mxu0 0
    %130 = vmatpush1.bf16.msra.mxu0 %v111
    %131 = vmatprep.subr.bf16.mxu0 0
    %132 = vmatpush1.bf16.msra.mxu0 %v110
    %133 = vmatprep.subr.bf16.mxu0 0
    %134 = vmatpush1.bf16.msra.mxu0 %v109
    %135 = vmatprep.subr.bf16.mxu0 0
    %136 = vmatpush1.bf16.msra.mxu0 %v108
    %137 = vmatprep.subr.bf16.mxu0 0
    %138 = vmatpush1.bf16.msra.mxu0 %v107
    %139 = vmatprep.subr.bf16.mxu0 0
    %140 = vmatpush2.bf16.msra.mxu0 0
    %141 = vmatprep.subr.bf16.mxu0 0
    %142 = vmatpush2.bf16.msra.mxu0 0
    %143 = vmatprep.subr.bf16.mxu0 0
    %144 = vmatpush2.bf16.msra.mxu0 0
    %145 = vmatprep.subr.bf16.mxu0 0
    %146 = vmatpush2.bf16.msra.mxu0 0
    %147 = vmatprep.subr.bf16.mxu0 0
    %148 = vmatpush2.bf16.msra.mxu0 0
    %149 = vmatprep.subr.bf16.mxu0 0
    %150 = vmatpush2.bf16.msra.mxu0 0
    %151 = vmatprep.subr.bf16.mxu0 0
    %152 = vmatpush2.bf16.msra.mxu0 0
    %153 = vmatprep.subr.bf16.mxu0 0
    %154 = vmatpush2.bf16.msra.mxu0 0
    %155 = vmatprep.mubr.bf16.mxu0 0
    %156 = vmatmul.mubr.bf16.gmra.mxu0 %v58
    %v157 = vpop.f32.mrf.mxu0
    %v158 = vadd.f32 0.0, %v157
    %v159 = vpop.f32.mrf.mxu0
    %v160 = vpop.f32.mrf.mxu0
    %v161 = vpop.f32.mrf.mxu0
    %162 = vdwg.mxu0
    %v163 = vmax.f32 %v158, 0.0
    %v164 = vpack.c.bf16 %v163, %v163
    %s165 = scalar_lea.vmem [#allocation2], 64
    %v166 = vld [vmem:[%s165] sm:$0xf]
    %v167 = vld [vmem:[%s165 + $0x4] sm:$0xf]
    %v168 = vld [vmem:[%s165 + $0x8] sm:$0xf]
    %v169 = vld [vmem:[%s165 + $0xc] sm:$0xf]
    %v170 = vld [vmem:[%s165 + $0x10] sm:$0xf]
    %v171 = vld [vmem:[%s165 + $0x14] sm:$0xf]
    %v172 = vld [vmem:[%s165 + $0x18] sm:$0xf]
    %v173 = vld [vmem:[%s165 + $0x1c] sm:$0xf]
    %v174 = vld [vmem:[%s165 + $0x20] sm:$0xf]
    %v175 = vld [vmem:[%s165 + $0x24] sm:$0xf]
    %v176 = vld [vmem:[%s165 + $0x28] sm:$0xf]
    %v177 = vld [vmem:[%s165 + $0x2c] sm:$0xf]
    %v178 = vld [vmem:[%s165 + $0x30] sm:$0xf]
    %v179 = vld [vmem:[%s165 + $0x34] sm:$0xf]
    %v180 = vld [vmem:[%s165 + $0x38] sm:$0xf]
    %v181 = vld [vmem:[%s165 + $0x3c] sm:$0xf]
    %v198 = vunpack.c.l.b16 %v166
    %v199 = vunpack.c.l.b16 %v167
    %v200 = vunpack.c.l.b16 %v168
    %v201 = vunpack.c.l.b16 %v169
    %v202 = vunpack.c.l.b16 %v170
    %v203 = vunpack.c.l.b16 %v171
    %v204 = vunpack.c.l.b16 %v172
    %v205 = vunpack.c.l.b16 %v173
    %v206 = vunpack.c.l.b16 %v174
    %v207 = vunpack.c.l.b16 %v175
    %v208 = vunpack.c.l.b16 %v176
    %v209 = vunpack.c.l.b16 %v177
    %v210 = vunpack.c.l.b16 %v178
    %v211 = vunpack.c.l.b16 %v179
    %v212 = vunpack.c.l.b16 %v180
    %v213 = vunpack.c.l.b16 %v181
    %v214 = vpack.c.b16 %v199, %v198
    %v215 = vpack.c.b16 %v201, %v200
    %v216 = vpack.c.b16 %v203, %v202
    %v217 = vpack.c.b16 %v205, %v204
    %v218 = vpack.c.b16 %v207, %v206
    %v219 = vpack.c.b16 %v209, %v208
    %v220 = vpack.c.b16 %v211, %v210
    %v221 = vpack.c.b16 %v213, %v212
    %230 = vmatprep.subr.bf16.mxu0 0
    %231 = vmatpush1.bf16.msra.mxu0 %v221
    %232 = vmatprep.subr.bf16.mxu0 0
    %233 = vmatpush1.bf16.msra.mxu0 %v220
    %234 = vmatprep.subr.bf16.mxu0 0
    %235 = vmatpush1.bf16.msra.mxu0 %v219
    %236 = vmatprep.subr.bf16.mxu0 0
    %237 = vmatpush1.bf16.msra.mxu0 %v218
    %238 = vmatprep.subr.bf16.mxu0 0
    %239 = vmatpush1.bf16.msra.mxu0 %v217
    %240 = vmatprep.subr.bf16.mxu0 0
    %241 = vmatpush1.bf16.msra.mxu0 %v216
    %242 = vmatprep.subr.bf16.mxu0 0
    %243 = vmatpush1.bf16.msra.mxu0 %v215
    %244 = vmatprep.subr.bf16.mxu0 0
    %245 = vmatpush1.bf16.msra.mxu0 %v214
    %246 = vmatprep.subr.bf16.mxu0 0
    %247 = vmatpush2.bf16.msra.mxu0 0
    %248 = vmatprep.subr.bf16.mxu0 0
    %249 = vmatpush2.bf16.msra.mxu0 0
    %250 = vmatprep.subr.bf16.mxu0 0
    %251 = vmatpush2.bf16.msra.mxu0 0
    %252 = vmatprep.subr.bf16.mxu0 0
    %253 = vmatpush2.bf16.msra.mxu0 0
    %254 = vmatprep.subr.bf16.mxu0 0
    %255 = vmatpush2.bf16.msra.mxu0 0
    %256 = vmatprep.subr.bf16.mxu0 0
    %257 = vmatpush2.bf16.msra.mxu0 0
    %258 = vmatprep.subr.bf16.mxu0 0
    %259 = vmatpush2.bf16.msra.mxu0 0
    %260 = vmatprep.subr.bf16.mxu0 0
    %261 = vmatpush2.bf16.msra.mxu0 0
    %262 = vmatprep.mubr.bf16.mxu0 0
    %263 = vmatmul.mubr.bf16.gmra.mxu0 %v164
    %v264 = vpop.f32.mrf.mxu0
    %v265 = vadd.f32 0.0, %v264
    %v266 = vpop.f32.mrf.mxu0
    %v267 = vpop.f32.mrf.mxu0
    %v268 = vpop.f32.mrf.mxu0
    %269 = vdwg.mxu0
    %v270 = vmax.f32 %v265, 0.0
    %v271 = vpack.c.bf16 %v270, %v270
    %s272 = scalar_lea.vmem [#allocation2], 128
    %v273 = vld [vmem:[%s272] sm:$0xf]
    %v274 = vld [vmem:[%s272 + $0x4] sm:$0xf]
    %v275 = vld [vmem:[%s272 + $0x8] sm:$0xf]
    %v276 = vld [vmem:[%s272 + $0xc] sm:$0xf]
    %v277 = vld [vmem:[%s272 + $0x10] sm:$0xf]
    %v278 = vld [vmem:[%s272 + $0x14] sm:$0xf]
    %v279 = vld [vmem:[%s272 + $0x18] sm:$0xf]
    %v280 = vld [vmem:[%s272 + $0x1c] sm:$0xf]
    %v281 = vld [vmem:[%s272 + $0x20] sm:$0xf]
    %v282 = vld [vmem:[%s272 + $0x24] sm:$0xf]
    %v283 = vld [vmem:[%s272 + $0x28] sm:$0xf]
    %v284 = vld [vmem:[%s272 + $0x2c] sm:$0xf]
    %v285 = vld [vmem:[%s272 + $0x30] sm:$0xf]
    %v286 = vld [vmem:[%s272 + $0x34] sm:$0xf]
    %v287 = vld [vmem:[%s272 + $0x38] sm:$0xf]
    %v288 = vld [vmem:[%s272 + $0x3c] sm:$0xf]
    %v305 = vunpack.c.l.b16 %v273
    %v306 = vunpack.c.l.b16 %v274
    %v307 = vunpack.c.l.b16 %v275
    %v308 = vunpack.c.l.b16 %v276
    %v309 = vunpack.c.l.b16 %v277
    %v310 = vunpack.c.l.b16 %v278
    %v311 = vunpack.c.l.b16 %v279
    %v312 = vunpack.c.l.b16 %v280
    %v313 = vunpack.c.l.b16 %v281
    %v314 = vunpack.c.l.b16 %v282
    %v315 = vunpack.c.l.b16 %v283
    %v316 = vunpack.c.l.b16 %v284
    %v317 = vunpack.c.l.b16 %v285
    %v318 = vunpack.c.l.b16 %v286
    %v319 = vunpack.c.l.b16 %v287
    %v320 = vunpack.c.l.b16 %v288
    %v321 = vpack.c.b16 %v306, %v305
    %v322 = vpack.c.b16 %v308, %v307
    %v323 = vpack.c.b16 %v310, %v309
    %v324 = vpack.c.b16 %v312, %v311
    %v325 = vpack.c.b16 %v314, %v313
    %v326 = vpack.c.b16 %v316, %v315
    %v327 = vpack.c.b16 %v318, %v317
    %v328 = vpack.c.b16 %v320, %v319
    %337 = vmatprep.subr.bf16.mxu0 0
    %338 = vmatpush1.bf16.msra.mxu0 %v328
    %339 = vmatprep.subr.bf16.mxu0 0
    %340 = vmatpush1.bf16.msra.mxu0 %v327
    %341 = vmatprep.subr.bf16.mxu0 0
    %342 = vmatpush1.bf16.msra.mxu0 %v326
    %343 = vmatprep.subr.bf16.mxu0 0
    %344 = vmatpush1.bf16.msra.mxu0 %v325
    %345 = vmatprep.subr.bf16.mxu0 0
    %346 = vmatpush1.bf16.msra.mxu0 %v324
    %347 = vmatprep.subr.bf16.mxu0 0
    %348 = vmatpush1.bf16.msra.mxu0 %v323
    %349 = vmatprep.subr.bf16.mxu0 0
    %350 = vmatpush1.bf16.msra.mxu0 %v322
    %351 = vmatprep.subr.bf16.mxu0 0
    %352 = vmatpush1.bf16.msra.mxu0 %v321
    %353 = vmatprep.subr.bf16.mxu0 0
    %354 = vmatpush2.bf16.msra.mxu0 0
    %355 = vmatprep.subr.bf16.mxu0 0
    %356 = vmatpush2.bf16.msra.mxu0 0
    %357 = vmatprep.subr.bf16.mxu0 0
    %358 = vmatpush2.bf16.msra.mxu0 0
    %359 = vmatprep.subr.bf16.mxu0 0
    %360 = vmatpush2.bf16.msra.mxu0 0
    %361 = vmatprep.subr.bf16.mxu0 0
    %362 = vmatpush2.bf16.msra.mxu0 0
    %363 = vmatprep.subr.bf16.mxu0 0
    %364 = vmatpush2.bf16.msra.mxu0 0
    %365 = vmatprep.subr.bf16.mxu0 0
    %366 = vmatpush2.bf16.msra.mxu0 0
    %367 = vmatprep.subr.bf16.mxu0 0
    %368 = vmatpush2.bf16.msra.mxu0 0
    %369 = vmatprep.mubr.bf16.mxu0 0
    %370 = vmatmul.mubr.bf16.gmra.mxu0 %v271
    %v371 = vpop.f32.mrf.mxu0
    %v372 = vadd.f32 0.0, %v371
    %v373 = vpop.f32.mrf.mxu0
    %v374 = vpop.f32.mrf.mxu0
    %v375 = vpop.f32.mrf.mxu0
    %376 = vdwg.mxu0
    %v377 = vmax.f32 %v372, 0.0
    %v378 = vpack.c.bf16 %v377, %v377
    %s379 = scalar_lea.vmem [#allocation2], 192
    %v380 = vld [vmem:[%s379] sm:$0xf]
    %v381 = vld [vmem:[%s379 + $0x4] sm:$0xf]
    %v382 = vld [vmem:[%s379 + $0x8] sm:$0xf]
    %v383 = vld [vmem:[%s379 + $0xc] sm:$0xf]
    %v384 = vld [vmem:[%s379 + $0x10] sm:$0xf]
    %v385 = vld [vmem:[%s379 + $0x14] sm:$0xf]
    %v386 = vld [vmem:[%s379 + $0x18] sm:$0xf]
    %v387 = vld [vmem:[%s379 + $0x1c] sm:$0xf]
    %v388 = vld [vmem:[%s379 + $0x20] sm:$0xf]
    %v389 = vld [vmem:[%s379 + $0x24] sm:$0xf]
    %v390 = vld [vmem:[%s379 + $0x28] sm:$0xf]
    %v391 = vld [vmem:[%s379 + $0x2c] sm:$0xf]
    %v392 = vld [vmem:[%s379 + $0x30] sm:$0xf]
    %v393 = vld [vmem:[%s379 + $0x34] sm:$0xf]
    %v394 = vld [vmem:[%s379 + $0x38] sm:$0xf]
    %v395 = vld [vmem:[%s379 + $0x3c] sm:$0xf]
    %v412 = vunpack.c.l.b16 %v380
    %v413 = vunpack.c.l.b16 %v381
    %v414 = vunpack.c.l.b16 %v382
    %v415 = vunpack.c.l.b16 %v383
    %v416 = vunpack.c.l.b16 %v384
    %v417 = vunpack.c.l.b16 %v385
    %v418 = vunpack.c.l.b16 %v386
    %v419 = vunpack.c.l.b16 %v387
    %v420 = vunpack.c.l.b16 %v388
    %v421 = vunpack.c.l.b16 %v389
    %v422 = vunpack.c.l.b16 %v390
    %v423 = vunpack.c.l.b16 %v391
    %v424 = vunpack.c.l.b16 %v392
    %v425 = vunpack.c.l.b16 %v393
    %v426 = vunpack.c.l.b16 %v394
    %v427 = vunpack.c.l.b16 %v395
    %v428 = vpack.c.b16 %v413, %v412
    %v429 = vpack.c.b16 %v415, %v414
    %v430 = vpack.c.b16 %v417, %v416
    %v431 = vpack.c.b16 %v419, %v418
    %v432 = vpack.c.b16 %v421, %v420
    %v433 = vpack.c.b16 %v423, %v422
    %v434 = vpack.c.b16 %v425, %v424
    %v435 = vpack.c.b16 %v427, %v426
    %444 = vmatprep.subr.bf16.mxu0 0
    %445 = vmatpush1.bf16.msra.mxu0 %v435
    %446 = vmatprep.subr.bf16.mxu0 0
    %447 = vmatpush1.bf16.msra.mxu0 %v434
    %448 = vmatprep.subr.bf16.mxu0 0
    %449 = vmatpush1.bf16.msra.mxu0 %v433
    %450 = vmatprep.subr.bf16.mxu0 0
    %451 = vmatpush1.bf16.msra.mxu0 %v432
    %452 = vmatprep.subr.bf16.mxu0 0
    %453 = vmatpush1.bf16.msra.mxu0 %v431
    %454 = vmatprep.subr.bf16.mxu0 0
    %455 = vmatpush1.bf16.msra.mxu0 %v430
    %456 = vmatprep.subr.bf16.mxu0 0
    %457 = vmatpush1.bf16.msra.mxu0 %v429
    %458 = vmatprep.subr.bf16.mxu0 0
    %459 = vmatpush1.bf16.msra.mxu0 %v428
    %460 = vmatprep.subr.bf16.mxu0 0
    %461 = vmatpush2.bf16.msra.mxu0 0
    %462 = vmatprep.subr.bf16.mxu0 0
    %463 = vmatpush2.bf16.msra.mxu0 0
    %464 = vmatprep.subr.bf16.mxu0 0
    %465 = vmatpush2.bf16.msra.mxu0 0
    %466 = vmatprep.subr.bf16.mxu0 0
    %467 = vmatpush2.bf16.msra.mxu0 0
    %468 = vmatprep.subr.bf16.mxu0 0
    %469 = vmatpush2.bf16.msra.mxu0 0
    %470 = vmatprep.subr.bf16.mxu0 0
    %471 = vmatpush2.bf16.msra.mxu0 0
    %472 = vmatprep.subr.bf16.mxu0 0
    %473 = vmatpush2.bf16.msra.mxu0 0
    %474 = vmatprep.subr.bf16.mxu0 0
    %475 = vmatpush2.bf16.msra.mxu0 0
    %476 = vmatprep.mubr.bf16.mxu0 0
    %477 = vmatmul.mubr.bf16.gmra.mxu0 %v378
    %v478 = vpop.f32.mrf.mxu0
    %v479 = vadd.f32 0.0, %v478
    %v480 = vpop.f32.mrf.mxu0
    %v481 = vpop.f32.mrf.mxu0
    %v482 = vpop.f32.mrf.mxu0
    %483 = vdwg.mxu0
    %484 = vst [vmem:[#allocation5] sm:$0xff] %v479
    // Predicated region
    $region18: #{tpu_custom_call.1} parent=1 // pred_check
      _
    $region19: #{tpu_custom_call.1} parent=1 // pred_check_branch
      %486 = sbr.rel (0) target = $region21
    $region20: #{tpu_custom_call.1} parent=1 // pred_region
      %s488 = ssub.s32 128, 128
      %489 = vsyncadd [#allocation4], %s488
      %s491 = sshll.u32 [#allocation5], 4
      %s492 = int_to_ptr.vmem [resolvable:$true] %s491
      %494 = dma.vmem_to_hbm [thread:$0]  %s492, 128, %s3, [#allocation4]
    $region21: #{tpu_custom_call.1} parent=1 // pred_fallthru
      _
    // Predicated region
    $region22: #{tpu_custom_call.1} parent=1 // pred_check
      _
    $region23: #{tpu_custom_call.1} parent=1 // pred_check_branch
      %496 = sbr.rel (0) target = $region25
    $region24: #{tpu_custom_call.1} parent=1 // pred_region
      %497 = dma.done [#allocation4], 128
    $region25: #{tpu_custom_call.1} parent=1 // pred_fallthru
      _
    %498 = vsyncpa [#allocation3], 1
    %499 = vsyncpa [#allocation4], 1

</llo_original>
